<compile_context>
chip_gen: v6e
topology: v6e:2x2x1
jax: 0.10.0
libtpu: 0.0.40
codegen_flags: <defaults>
</compile_context>

<pallas_src>
import numpy as np
import jax
import jax.numpy as jnp
from jax.experimental import pallas as pl
from jax.experimental.pallas import tpu as pltpu


def _elu(v):
    return jnp.where(v > 0, v, jnp.exp(v) - 1.0)


def _gated_conv2d_kernel(x_ref, w_ref, b_ref, o_ref, f_ref):
    # x_ref: (1, H_pad + 2, W*C)   row-padded image, lane-flattened (NHWC order)
    # w_ref: (3, 2*W*C, W*Cout)    folded conv weights (dy, K, M)
    # b_ref: (1, W*Cout)           bias tiled across W
    # o_ref: (1, tH, W*Cout)       output row strip
    # f_ref: (tH + 2, 2*W*C) f32   scratch: [elu(x) | elu(-x)] rows incl. halo
    t_h = o_ref.shape[1]
    wc = x_ref.shape[2]
    wco = o_ref.shape[2]

    t = pl.program_id(1)
    row0 = pl.multiple_of(t * t_h, t_h)   # top halo row of this strip (padded coords)

    # Features for the strip plus one halo row on each side.  The wrapper's
    # zero pad rows give elu(0) == 0, i.e. exactly the conv's zero padding,
    # so the scratch is fully overwritten and nothing needs zeroing here.
    xw = x_ref[0, pl.ds(row0, t_h + 2), :].astype(jnp.float32)   # (tH+2, W*C)
    f_ref[:, :wc] = _elu(xw)
    f_ref[:, wc:] = _elu(-xw)

    # 3x3 "same" conv: dx and cin are folded into K, so one dot per dy.
    # Accumulator starts at the broadcast bias (tiled over W in the wrapper).
    acc = jnp.broadcast_to(b_ref[...].astype(jnp.float32), (t_h, wco))
    for dy in range(3):
        acc = acc + jnp.dot(f_ref[dy:dy + t_h, :], w_ref[dy],
                            preferred_element_type=jnp.float32)

    # Gating + residual: out = x + elu(z) * sigmoid(elu(-z)).  The residual is
    # the interior rows of the already-loaded strip; Cout == C so the layouts
    # of xs and acc coincide (no reshape).
    xs = xw[1:t_h + 1, :]
    neg = _elu(-acc)
    gate = _elu(acc) * pl.reciprocal(1.0 + jnp.exp(-neg), approx=True)
    o_ref[0] = (xs + gate).astype(o_ref.dtype)


def _pick_strip(H):
    # >= 8 rows (sublane tile) to amortize the ~0.35 us per-grid-step overhead
    # and give the MXU a reasonable M; H is padded up to a multiple of tH in
    # the wrapper, so tH does not need to divide H.
    if H <= 8:
        return H
    if H >= 64:
        return 32
    if H >= 32:
        return 16
    return 8


def _vmem_limit_bytes():
    # Generation-aware scoped-VMEM limit (128 MiB physical on v5e/v6e, 64 MiB
    # per TensorCore on v7x).  Falls back to a value that fits every chip.
    cap = None
    try:
        cap = getattr(pltpu.get_tpu_info(), "vmem_capacity_bytes", None)
    except Exception:
        cap = None
    if not cap:
        cap = 64 * 1024 * 1024
    return int(cap) * 3 // 4


def gated_conv2d(x_nchw, w_oihw, b):
    """x_nchw: (N, C, H, W); w_oihw: (Cout, 2C, 3, 3); b: (Cout,). Returns NCHW."""
    N, C, H, W = x_nchw.shape
    Cout = w_oihw.shape[0]
    assert Cout == C, "GatedConv2d forward requires out_channels == in_channels"
    assert w_oihw.shape == (Cout, 2 * C, 3, 3)

    t_h = _pick_strip(H)
    n_strips = -(-H // t_h)            # cdiv
    H_pad = n_strips * t_h
    wc = W * C
    wco = W * Cout

    # Interface glue: NCHW -> NHWC -> lane-flattened (N, H, W*C).  Pad one
    # zero halo row on top and (H_pad - H + 1) on the bottom (bottom halo +
    # strip-divisibility padding); elu(0) == 0 reproduces conv zero padding.
    x_flat = jnp.transpose(x_nchw, (0, 2, 3, 1)).reshape(N, H, wc)
    x_padded = jnp.pad(x_flat, ((0, 0), (1, H_pad - H + 1), (0, 0)))

    # Fold (dx, cin) and the column zero-padding into banded matmul weights:
    # Wfold[dy, half*W*C + wi*C + ci, wo*Cout + co]
    #   = w[co, half*C + ci, dy, wi - wo + 1]  if 0 <= wi - wo + 1 < 3 else 0
    w6 = jnp.transpose(w_oihw, (2, 3, 1, 0)).reshape(3, 3, 2, C, Cout)
    band = np.stack([np.eye(W, k=1 - dx, dtype=np.float32) for dx in range(3)])
    w_folded = jnp.einsum('yxhic,xvw->yhviwc', w6.astype(jnp.float32),
                          jnp.asarray(band))
    w_folded = w_folded.reshape(3, 2 * wc, wco)

    b_flat = jnp.tile(b.astype(jnp.float32), W).reshape(1, wco)

    out_flat = pl.pallas_call(
        _gated_conv2d_kernel,
        out_shape=jax.ShapeDtypeStruct((N, H_pad, wco), x_nchw.dtype),
        grid_spec=pltpu.PrefetchScalarGridSpec(
            num_scalar_prefetch=0,
            grid=(N, n_strips),
            in_specs=[
                # Full (row-padded) image per batch element; block index is
                # constant along the strip axis so it is DMA'd once per n.
                pl.BlockSpec((1, H_pad + 2, wc), lambda n, t: (n, 0, 0)),
                pl.BlockSpec((3, 2 * wc, wco), lambda n, t: (0, 0, 0)),
                pl.BlockSpec((1, wco), lambda n, t: (0, 0)),
            ],
            out_specs=pl.BlockSpec((1, t_h, wco), lambda n, t: (n, t, 0)),
            scratch_shapes=[pltpu.VMEM((t_h + 2, 2 * wc), jnp.float32)],
        ),
        compiler_params=pltpu.CompilerParams(
            # Strip axis "arbitrary": with the full-image-resident input
            # block, sharding t across v7x's two TensorCores would duplicate
            # the largest buffer per core (review guidance).
            dimension_semantics=("parallel", "arbitrary"),
            vmem_limit_bytes=_vmem_limit_bytes(),
        ),
    )(x_padded, w_folded, b_flat)

    out = out_flat[:, :H, :].reshape(N, H, W, Cout)
    return jnp.transpose(out, (0, 3, 1, 2))                       # NCHW


def _reference(x, w, b):
    """Pure-JAX reference of the PyTorch forward (NCHW)."""
    y = jax.nn.elu(jnp.concatenate([x, -x], axis=1))
    y = jax.lax.conv_general_dilated(
        y, w, window_strides=(1, 1), padding=((1, 1), (1, 1)),
        dimension_numbers=("NCHW", "OIHW", "NCHW"))
    y = y + b.reshape(1, -1, 1, 1)
    return x + jax.nn.elu(y) * jax.nn.sigmoid(jax.nn.elu(-y))


if __name__ == "__main__":
    N, C, H, W = 2, 4, 16, 16
    key = jax.random.PRNGKey(0)
    kx, kw, kb = jax.random.split(key, 3)

    x = jax.random.normal(kx, (N, C, H, W), dtype=jnp.float32)

    # Deterministic Conv2d(2C -> C, 3x3) params (PyTorch-style uniform init).
    fan_in = 2 * C * 3 * 3
    bound = 1.0 / (fan_in ** 0.5)
    w = jax.random.uniform(kw, (C, 2 * C, 3, 3), minval=-bound, maxval=bound,
                           dtype=jnp.float32)
    b = jax.random.uniform(kb, (C,), minval=-bound, maxval=bound,
                           dtype=jnp.float32)

    out = jax.block_until_ready(gated_conv2d(x, w, b))
    ref = _reference(x, w, b)

    assert out.shape == (N, C, H, W)
    max_err = float(jnp.max(jnp.abs(out - ref)))
    # Tolerance relaxed from 1e-5 because of the approximate EUP reciprocal in
    # the sigmoid (intentional, per review).
    assert jnp.allclose(out, ref, atol=5e-3, rtol=5e-3), max_err

    print("KERNEL_OK")
</pallas_src>

<mosaic_0001>
module attributes {stable_mosaic.version = 11 : i64} {
  func.func @_gated_conv2d_kernel(%arg0: i32, %arg1: i32, %arg2: memref<1x18x64xf32, #tpu.memory_space<vmem>>, %arg3: memref<3x128x64xf32, #tpu.memory_space<vmem>>, %arg4: memref<1x64xf32, #tpu.memory_space<vmem>>, %arg5: memref<1x8x64xf32, #tpu.memory_space<vmem>>, %arg6: memref<10x128xf32, #tpu.memory_space<vmem>>) attributes {dimension_semantics = [#tpu.dimension_semantics<parallel>, #tpu.dimension_semantics<arbitrary>], iteration_bounds = array<i64: 2, 2>, scalar_prefetch = 0 : i64, scratch_operands = 1 : i64, tpu.core_type = #tpu.core_type<tc>, window_params = [{transform_indices = @transform_0, window_bounds = array<i64: 1, 18, 64>}, {pipeline_mode = #tpu.pipeline_mode<synchronous>, transform_indices = @transform_1, window_bounds = array<i64: 3, 128, 64>}, {pipeline_mode = #tpu.pipeline_mode<synchronous>, transform_indices = @transform_2, window_bounds = array<i64: 1, 64>}, {transform_indices = @transform_3, window_bounds = array<i64: 1, 8, 64>}]} {
    %c8_i32 = arith.constant 8 : i32
    %0 = arith.muli %arg1, %c8_i32 : i32
    %1 = tpu.assume_multiple %0, 8 : i32
    %c0 = arith.constant 0 : index
    %2 = arith.index_cast %1 : i32 to index
    %c0_0 = arith.constant 0 : index
    %3 = vector.load %arg2[%c0, %2, %c0_0] : memref<1x18x64xf32, #tpu.memory_space<vmem>>, vector<1x10x64xf32>
    %4 = vector.shape_cast %3 : vector<1x10x64xf32> to vector<10x64xf32>
    %cst = arith.constant 0.000000e+00 : f32
    %5 = vector.broadcast %cst : f32 to vector<10x64xf32>
    %6 = arith.cmpf ogt, %4, %5 : vector<10x64xf32>
    %7 = math.exp %4 : vector<10x64xf32>
    %cst_1 = arith.constant 1.000000e+00 : f32
    %8 = vector.broadcast %cst_1 : f32 to vector<10x64xf32>
    %9 = arith.subf %7, %8 : vector<10x64xf32>
    %10 = arith.select %6, %4, %9 : vector<10x64xi1>, vector<10x64xf32>
    %c0_2 = arith.constant 0 : index
    %c0_3 = arith.constant 0 : index
    %11 = vector.load %arg6[%c0_2, %c0_3] : memref<10x128xf32, #tpu.memory_space<vmem>>, vector<10x64xf32>
    tpu.vector_store %arg6[%c0_2, %c0_3], %10 {strides = array<i32>} : memref<10x128xf32, #tpu.memory_space<vmem>>, vector<10x64xf32>,
    %cst_4 = arith.constant 0.000000e+00 : f32
    %12 = vector.broadcast %cst_4 : f32 to vector<10x64xf32>
    %13 = arith.subf %12, %4 : vector<10x64xf32>
    %cst_5 = arith.constant 0.000000e+00 : f32
    %14 = vector.broadcast %cst_5 : f32 to vector<10x64xf32>
    %15 = arith.cmpf ogt, %13, %14 : vector<10x64xf32>
    %16 = math.exp %13 : vector<10x64xf32>
    %cst_6 = arith.constant 1.000000e+00 : f32
    %17 = vector.broadcast %cst_6 : f32 to vector<10x64xf32>
    %18 = arith.subf %16, %17 : vector<10x64xf32>
    %19 = arith.select %15, %13, %18 : vector<10x64xi1>, vector<10x64xf32>
    %c0_7 = arith.constant 0 : index
    %c64 = arith.constant 64 : index
    %20 = vector.load %arg6[%c0_7, %c64] : memref<10x128xf32, #tpu.memory_space<vmem>>, vector<10x64xf32>
    tpu.vector_store %arg6[%c0_7, %c64], %19 {strides = array<i32>} : memref<10x128xf32, #tpu.memory_space<vmem>>, vector<10x64xf32>,
    %c0_8 = arith.constant 0 : index
    %c0_9 = arith.constant 0 : index
    %21 = vector.load %arg4[%c0_8, %c0_9] : memref<1x64xf32, #tpu.memory_space<vmem>>, vector<1x64xf32>
    %22 = vector.shape_cast %21 : vector<1x64xf32> to vector<1x64xf32>
    %23 = vector.broadcast %22 : vector<1x64xf32> to vector<8x64xf32>
    %c0_10 = arith.constant 0 : index
    %c0_11 = arith.constant 0 : index
    %24 = vector.load %arg6[%c0_10, %c0_11] : memref<10x128xf32, #tpu.memory_space<vmem>>, vector<8x128xf32>
    %c0_12 = arith.constant 0 : index
    %c0_13 = arith.constant 0 : index
    %c0_14 = arith.constant 0 : index
    %25 = vector.load %arg3[%c0_12, %c0_13, %c0_14] : memref<3x128x64xf32, #tpu.memory_space<vmem>>, vector<1x128x64xf32>
    %26 = vector.shape_cast %25 : vector<1x128x64xf32> to vector<128x64xf32>
    %cst_15 = arith.constant dense<0.000000e+00> : vector<8x64xf32>
    %27 = tpu.matmul %24, %26, %cst_15 {dimension_numbers = #tpu.dot_dimension_numbers<[1], [0], [0], [1], [0, 0, 1, 1], [], []>} : vector<8x128xf32>, vector<128x64xf32>, vector<8x64xf32> -> vector<8x64xf32>
    %28 = arith.addf %23, %27 : vector<8x64xf32>
    %c1 = arith.constant 1 : index
    %c0_16 = arith.constant 0 : index
    %29 = vector.load %arg6[%c1, %c0_16] : memref<10x128xf32, #tpu.memory_space<vmem>>, vector<8x128xf32>
    %c1_17 = arith.constant 1 : index
    %c0_18 = arith.constant 0 : index
    %c0_19 = arith.constant 0 : index
    %30 = vector.load %arg3[%c1_17, %c0_18, %c0_19] : memref<3x128x64xf32, #tpu.memory_space<vmem>>, vector<1x128x64xf32>
    %31 = vector.shape_cast %30 : vector<1x128x64xf32> to vector<128x64xf32>
    %cst_20 = arith.constant dense<0.000000e+00> : vector<8x64xf32>
    %32 = tpu.matmul %29, %31, %cst_20 {dimension_numbers = #tpu.dot_dimension_numbers<[1], [0], [0], [1], [0, 0, 1, 1], [], []>} : vector<8x128xf32>, vector<128x64xf32>, vector<8x64xf32> -> vector<8x64xf32>
    %33 = arith.addf %28, %32 : vector<8x64xf32>
    %c2 = arith.constant 2 : index
    %c0_21 = arith.constant 0 : index
    %34 = vector.load %arg6[%c2, %c0_21] : memref<10x128xf32, #tpu.memory_space<vmem>>, vector<8x128xf32>
    %c2_22 = arith.constant 2 : index
    %c0_23 = arith.constant 0 : index
    %c0_24 = arith.constant 0 : index
    %35 = vector.load %arg3[%c2_22, %c0_23, %c0_24] : memref<3x128x64xf32, #tpu.memory_space<vmem>>, vector<1x128x64xf32>
    %36 = vector.shape_cast %35 : vector<1x128x64xf32> to vector<128x64xf32>
    %cst_25 = arith.constant dense<0.000000e+00> : vector<8x64xf32>
    %37 = tpu.matmul %34, %36, %cst_25 {dimension_numbers = #tpu.dot_dimension_numbers<[1], [0], [0], [1], [0, 0, 1, 1], [], []>} : vector<8x128xf32>, vector<128x64xf32>, vector<8x64xf32> -> vector<8x64xf32>
    %38 = arith.addf %33, %37 : vector<8x64xf32>
    %39 = vector.extract_strided_slice %4 {offsets = [1, 0], sizes = [8, 64], strides = [1, 1]} : vector<10x64xf32> to vector<8x64xf32>
    %cst_26 = arith.constant 0.000000e+00 : f32
    %40 = vector.broadcast %cst_26 : f32 to vector<8x64xf32>
    %41 = arith.subf %40, %38 : vector<8x64xf32>
    %cst_27 = arith.constant 0.000000e+00 : f32
    %42 = vector.broadcast %cst_27 : f32 to vector<8x64xf32>
    %43 = arith.cmpf ogt, %41, %42 : vector<8x64xf32>
    %44 = math.exp %41 : vector<8x64xf32>
    %cst_28 = arith.constant 1.000000e+00 : f32
    %45 = vector.broadcast %cst_28 : f32 to vector<8x64xf32>
    %46 = arith.subf %44, %45 : vector<8x64xf32>
    %47 = arith.select %43, %41, %46 : vector<8x64xi1>, vector<8x64xf32>
    %cst_29 = arith.constant 0.000000e+00 : f32
    %48 = vector.broadcast %cst_29 : f32 to vector<8x64xf32>
    %49 = arith.cmpf ogt, %38, %48 : vector<8x64xf32>
    %50 = math.exp %38 : vector<8x64xf32>
    %cst_30 = arith.constant 1.000000e+00 : f32
    %51 = vector.broadcast %cst_30 : f32 to vector<8x64xf32>
    %52 = arith.subf %50, %51 : vector<8x64xf32>
    %53 = arith.select %49, %38, %52 : vector<8x64xi1>, vector<8x64xf32>
    %cst_31 = arith.constant 0.000000e+00 : f32
    %54 = vector.broadcast %cst_31 : f32 to vector<8x64xf32>
    %55 = arith.subf %54, %47 : vector<8x64xf32>
    %56 = math.exp %55 : vector<8x64xf32>
    %cst_32 = arith.constant 1.000000e+00 : f32
    %57 = vector.broadcast %cst_32 : f32 to vector<8x64xf32>
    %58 = arith.addf %57, %56 : vector<8x64xf32>
    %59 = tpu.reciprocal %58 {approx = true} : vector<8x64xf32> -> vector<8x64xf32>
    %60 = arith.mulf %53, %59 : vector<8x64xf32>
    %61 = arith.addf %39, %60 : vector<8x64xf32>
    %c0_33 = arith.constant 0 : index
    %c0_34 = arith.constant 0 : index
    %c0_35 = arith.constant 0 : index
    %62 = vector.load %arg5[%c0_33, %c0_34, %c0_35] : memref<1x8x64xf32, #tpu.memory_space<vmem>>, vector<1x8x64xf32>
    %63 = vector.shape_cast %62 : vector<1x8x64xf32> to vector<8x64xf32>
    %64 = vector.shape_cast %61 : vector<8x64xf32> to vector<1x8x64xf32>
    tpu.vector_store %arg5[%c0_33, %c0_34, %c0_35], %64 {strides = array<i32>} : memref<1x8x64xf32, #tpu.memory_space<vmem>>, vector<1x8x64xf32>,
    return
  }
  func.func @transform_0(%arg0: i32, %arg1: i32) -> (i32, i32, i32) {
    %c0_i32 = arith.constant 0 : i32
    %c0_i32_0 = arith.constant 0 : i32
    %c0_i32_1 = arith.constant 0 : i32
    return %arg0, %c0_i32, %c0_i32_0 : i32, i32, i32
  }
  func.func @transform_1(%arg0: i32, %arg1: i32) -> (i32, i32, i32) {
    %c0_i32 = arith.constant 0 : i32
    %c0_i32_0 = arith.constant 0 : i32
    %c0_i32_1 = arith.constant 0 : i32
    %c0_i32_2 = arith.constant 0 : i32
    return %c0_i32, %c0_i32_0, %c0_i32_1 : i32, i32, i32
  }
  func.func @transform_2(%arg0: i32, %arg1: i32) -> (i32, i32) {
    %c0_i32 = arith.constant 0 : i32
    %c0_i32_0 = arith.constant 0 : i32
    %c0_i32_1 = arith.constant 0 : i32
    return %c0_i32, %c0_i32_0 : i32, i32
  }
  func.func @transform_3(%arg0: i32, %arg1: i32) -> (i32, i32, i32) {
    %c0_i32 = arith.constant 0 : i32
    %c0_i32_0 = arith.constant 0 : i32
    return %arg0, %arg1, %c0_i32 : i32, i32, i32
  }
}

</mosaic_0001>

<llo_original>
// kernel: tpu_custom_call.1
$region0: #{tpu_custom_call.1}
  #allocation0 [shape = 'u32[]', space=smem, size = 0x4, offset = 0x4, fixed_abs, tag = 'smem constant byte address 0x4 - core index']
  #allocation1 [shape = 'u32[144,128]{1,0:T(1,128)}', space=vmem, size = 0x12000, scoped, tag = 'internal scratch']
  #allocation2 [shape = 'f32[10,128]{1,0:T(8,128)}', space=vmem, size = 0x2000, scoped, tag = 'scratch operand']
  %s0 = inlined_call_operand.vmem [shape: f32[2,18,64], index: 0, kind: input, shape index: {}]
  %s1 = inlined_call_operand.vmem [shape: f32[3,128,64], index: 1, kind: input, shape index: {}]
  %s2 = inlined_call_operand.vmem [shape: f32[1,64], index: 2, kind: input, shape index: {}]
  %s3 = inlined_call_operand.hbm [shape: f32[2,16,64], index: 3, kind: output, shape index: {}]
  %s4 = sld [smem:[#allocation0]]
  $region45: #{tpu_custom_call.1} parent=0
    _
  %s6 = ssub.s32 1, %s4
  %s7 = scalar_select 0, %s6, %s4
  $region1: #{tpu_custom_call.1} parent=0
    #allocation3 [shape = 'u8[8192]{0}', space=vmem, size = 0x2000, scoped, tag = 'output window, operand 0']
    #allocation4 [shape = 's32[2]{0}', space=sflag, size = 0x8, scoped, tag = 'scoped memory for tpu_custom_call.1']
    %8 = vsyncpa [#allocation4], 0
    %s9 = scalar_lea.sflag [#allocation4], 1
    %10 = vsyncpa %s9, 0
    loop: start=0, step=1, limit=6
    $region2: #{tpu_custom_call.1} parent=1 // loop_pre_header
      _
    $region3: #{tpu_custom_call.1} parent=1 // loop_header
      %s12 = sphi 0, %s16
      %p13 = scmp.ge.s32.totalorder %s12, 6
      %s19 = sphi 0, %s31
      %s20 = sphi 0, %s27
      %s21 = sphi 0, %s19
      %s22 = sphi 0, %s20
      %s23 = sphi 0, %s21
      %s24 = sphi 0, %s22
      %s34 = sphi 0, %s36
      %s37 = sphi 0, %s34
      %s38 = sphi 0, %s37
      %s54 = sphi 0, %s38
      %s58 = sphi 0, %s58
      %s60 = sphi 0, %s58
      %s61 = sphi 0, %s60
      %s75 = sphi 0, %s61
      %s79 = sphi 0, %s79
      %s81 = sphi 0, %s79
      %s82 = sphi 0, %s81
      %s96 = sphi 0, %s82
      %s104 = sphi 0, %s106
      %s107 = sphi 0, %s104
      %s108 = sphi 0, %s107
      %s124 = sphi 0, %s108
    $region4: #{tpu_custom_call.1} parent=1 // loop_header_branch
      %15 = sbr.rel (%p13) target = $region8
    $region5: #{tpu_custom_call.1} parent=1 // loop_body
      %s17 = ssub.s32 %s12, 1
      %s18 = ssub.s32 %s12, 2
      %s25 = sadd.s32 1, %s20
      %p26 = scmp.ge.s32.totalorder %s25, 2
      %s27 = scalar_select %p26, 0, %s25
      %s28 = sadd.s32 1, %s19
      %s29 = scalar_select %p26, %s28, %s19
      %p30 = scmp.ge.s32.totalorder %s29, 2
      %s31 = scalar_select %p30, 0, %s29
      %s32 = ssub.s32 %s19, %s31
      %p33 = scmp.eq.s32.totalorder %s32, 0
      %s35 = sadd.s32 %s34, 1
      %s36 = scalar_select %p33, %s34, %s35
      %p39 = pneg %p33
      %p40 = scmp.eq.s32.totalorder %s12, 3
      %p41 = por %p39, %p40
      %p42 = scmp.ne.s32.totalorder %s34, %s37
      %p43 = scmp.eq.s32.totalorder %s12, 0
      %p44 = por %p42, %p43
      %p45 = scmp.ne.s32.totalorder %s34, %s37
      %p46 = scmp.eq.s32.totalorder %s17, 3
      %p47 = por %p45, %p46
      %p48 = scmp.ne.s32.totalorder %s37, %s38
      %p49 = scmp.eq.s32.totalorder %s17, 0
      %p50 = por %p48, %p49
      %p51 = scmp.ne.s32.totalorder %s37, %s38
      %p52 = scmp.eq.s32.totalorder %s18, 3
      %p53 = por %p51, %p52
      %p55 = scmp.ne.s32.totalorder %s38, %s54
      %p56 = scmp.eq.s32.totalorder %s18, 0
      %p57 = por %p55, %p56
      %s59 = sadd.s32 %s58, 1
      %p62 = scmp.eq.s32.totalorder %s12, 3
      %p63 = scmp.ne.s32.totalorder %s58, %s60
      %p64 = scmp.eq.s32.totalorder %s12, 0
      %p65 = por %p63, %p64
      %p66 = scmp.ne.s32.totalorder %s58, %s60
      %p67 = scmp.eq.s32.totalorder %s17, 3
      %p68 = por %p66, %p67
      %p69 = scmp.ne.s32.totalorder %s60, %s61
      %p70 = scmp.eq.s32.totalorder %s17, 0
      %p71 = por %p69, %p70
      %p72 = scmp.ne.s32.totalorder %s60, %s61
      %p73 = scmp.eq.s32.totalorder %s18, 3
      %p74 = por %p72, %p73
      %p76 = scmp.ne.s32.totalorder %s61, %s75
      %p77 = scmp.eq.s32.totalorder %s18, 0
      %p78 = por %p76, %p77
      %s80 = sadd.s32 %s79, 1
      %p83 = scmp.eq.s32.totalorder %s12, 3
      %p84 = scmp.ne.s32.totalorder %s79, %s81
      %p85 = scmp.eq.s32.totalorder %s12, 0
      %p86 = por %p84, %p85
      %p87 = scmp.ne.s32.totalorder %s79, %s81
      %p88 = scmp.eq.s32.totalorder %s17, 3
      %p89 = por %p87, %p88
      %p90 = scmp.ne.s32.totalorder %s81, %s82
      %p91 = scmp.eq.s32.totalorder %s17, 0
      %p92 = por %p90, %p91
      %p93 = scmp.ne.s32.totalorder %s81, %s82
      %p94 = scmp.eq.s32.totalorder %s18, 3
      %p95 = por %p93, %p94
      %p97 = scmp.ne.s32.totalorder %s82, %s96
      %p98 = scmp.eq.s32.totalorder %s18, 0
      %p99 = por %p97, %p98
      %s100 = ssub.s32 %s19, %s31
      %s101 = ssub.s32 %s20, %s27
      %s102 = sor.u32 %s100, %s101
      %p103 = scmp.eq.s32.totalorder %s102, 0
      %s105 = sadd.s32 %s104, 1
      %s106 = scalar_select %p103, %s104, %s105
      %p109 = pneg %p103
      %p110 = scmp.eq.s32.totalorder %s12, 3
      %p111 = por %p109, %p110
      %p112 = scmp.ne.s32.totalorder %s104, %s107
      %p113 = scmp.eq.s32.totalorder %s12, 0
      %p114 = por %p112, %p113
      %p115 = scmp.ne.s32.totalorder %s104, %s107
      %p116 = scmp.eq.s32.totalorder %s17, 3
      %p117 = por %p115, %p116
      %p118 = scmp.ne.s32.totalorder %s107, %s108
      %p119 = scmp.eq.s32.totalorder %s17, 0
      %p120 = por %p118, %p119
      %p121 = scmp.ne.s32.totalorder %s107, %s108
      %p122 = scmp.eq.s32.totalorder %s18, 3
      %p123 = por %p121, %p122
      %p125 = scmp.ne.s32.totalorder %s108, %s124
      %p126 = scmp.eq.s32.totalorder %s18, 0
      %p127 = por %p125, %p126
      %p128 = scmp.le.s32.totalorder 1, %s12
      %p129 = scmp.lt.s32.totalorder %s12, 5
      %p130 = pnand %p128, %p129
      %p131 = pneg %p130
      // Predicated region
      $region9: #{tpu_custom_call.1} parent=5 // pred_check
        _
      $region10: #{tpu_custom_call.1} parent=5 // pred_check_branch
        %133 = sbr.rel (%p130) target = $region12
      $region11: #{tpu_custom_call.1} parent=5 // pred_region
        %s134 = ssub.s32 %s12, 1
        // Predicated region
        $region13: #{tpu_custom_call.1} parent=11 // pred_check
          %p135 = pneg %p71
        $region14: #{tpu_custom_call.1} parent=11 // pred_check_branch
          %137 = sbr.rel (%p135) target = $region16
        $region15: #{tpu_custom_call.1} parent=11 // pred_region
          _
        $region16: #{tpu_custom_call.1} parent=11 // pred_fallthru
          _
        // Predicated region
        $region17: #{tpu_custom_call.1} parent=11 // pred_check
          %p138 = pneg %p92
        $region18: #{tpu_custom_call.1} parent=11 // pred_check_branch
          %140 = sbr.rel (%p138) target = $region20
        $region19: #{tpu_custom_call.1} parent=11 // pred_region
          _
        $region20: #{tpu_custom_call.1} parent=11 // pred_fallthru
          _
      $region12: #{tpu_custom_call.1} parent=5 // pred_fallthru
        _
      %p141 = scmp.lt.s32.totalorder %s12, 4
      // Predicated region
      $region21: #{tpu_custom_call.1} parent=5 // pred_check
        %p142 = pneg %p141
      $region22: #{tpu_custom_call.1} parent=5 // pred_check_branch
        %144 = sbr.rel (%p142) target = $region24
      $region23: #{tpu_custom_call.1} parent=5 // pred_region
        // Predicated region
        $region25: #{tpu_custom_call.1} parent=23 // pred_check
          %p145 = pneg %p44
        $region26: #{tpu_custom_call.1} parent=23 // pred_check_branch
          %147 = sbr.rel (%p145) target = $region28
        $region27: #{tpu_custom_call.1} parent=23 // pred_region
          %p148 = scmp.lt.s32.totalorder %s19, 1
          %s149 = scalar_select %p148, %s19, 1
          %s150 = smul.addr %s149, 3
          %s151 = smul.addr %s150, 8
          %s152 = scalar_lea.vmem %s0, %s151
        $region28: #{tpu_custom_call.1} parent=23 // pred_fallthru
          _
      $region24: #{tpu_custom_call.1} parent=5 // pred_fallthru
        _
      %p153 = scmp.le.s32.totalorder 1, %s12
      %p154 = scmp.lt.s32.totalorder %s12, 5
      %p155 = pnand %p153, %p154
      %p156 = pneg %p155
      // Predicated region
      $region29: #{tpu_custom_call.1} parent=5 // pred_check
        _
      $region30: #{tpu_custom_call.1} parent=5 // pred_check_branch
        %158 = sbr.rel (%p155) target = $region32
      $region31: #{tpu_custom_call.1} parent=5 // pred_region
        %s159 = ssub.s32 %s12, 1
        %p160 = scmp.lt.s32.totalorder %s21, 1
        %s161 = scalar_select %p160, %s21, 1
        %s162 = smul.addr %s161, 3
        %s163 = smul.addr %s162, 8
        %s164 = scalar_lea.vmem %s0, %s163
        %p165 = pneg %p50
        %p166 = pneg %p47
        %p167 = pneg %p71
        %p168 = pneg %p68
        %p169 = pneg %p92
        %p170 = pneg %p89
        %p171 = pneg %p120
        %p172 = pneg %p117
        %s173 = sand.u32 %s107, 1
        %s174 = scalar_lea.sflag [#allocation4], %s173
        %s175 = sand.u32 %s107, 1
        %s176 = smul.addr %s175, 8
        %s177 = scalar_lea.vmem [#allocation3], %s176
        %p178 = scmp.lt.s32.totalorder %s21, 1
        %s179 = scalar_select %p178, %s21, 1
        %s180 = smul.addr %s179, 3
        %s181 = smul.addr %s180, 8
        %s182 = scalar_lea.vmem %s0, %s181
        %s183 = smul.u32 %s22, 8
        %s184 = scalar_lea.vmem %s182, %s183
        %v185 = vld [vmem:[%s184] sm:$0xff]
        %v186 = vld [vmem:[%s184 + $0x8] sm:$0x3]
        %vm187 = vcmp.gt.f32.partialorder %v185, 0.0
        %vm188 = vcmp.gt.f32.partialorder %v186, 0.0
        %v189 = vmul.f32 %v185, 1.442695
        %v190 = vpow.pop %v189
        %v191 = vmul.f32 %v186, 1.442695
        %v192 = vpow.pop %v191
        %v193 = vsub.f32 %v190, 1.0
        %v194 = vsub.f32 %v192, 1.0
        %v195 = vsel %vm187, %v185, %v193
        %v196 = vsel %vm188, %v186, %v194
        %vm197 = vcmask 523264
        %198 = vst.msk [vmem:[#allocation2] sm:$0xff] %vm197, %v195
        %vm199 = vcmask 517120
        %200 = vst.msk [vmem:[#allocation2 + $0x8] sm:$0x3] %vm199, %v196
        %v201 = vsub.f32 0.0, %v185
        %v202 = vsub.f32 0.0, %v186
        %vm203 = vcmp.gt.f32.partialorder %v201, 0.0
        %vm204 = vcmp.gt.f32.partialorder %v202, 0.0
        %v205 = vmul.f32 %v201, 1.442695
        %v206 = vpow.pop %v205
        %v207 = vmul.f32 %v202, 1.442695
        %v208 = vpow.pop %v207
        %v209 = vsub.f32 %v206, 1.0
        %v210 = vsub.f32 %v208, 1.0
        %v211 = vsel %vm203, %v201, %v209
        %v212 = vsel %vm204, %v202, %v210
        %215 = vrot.lane.b32.xlu0 %v211, 64
        %v216 = vpop.permute.xlu0 %215
        %217 = vrot.lane.b32.xlu0 %v212, 64
        %v218 = vpop.permute.xlu0 %217
        %vm221 = vcmask 1048064
        %222 = vst.msk [vmem:[#allocation2] sm:$0xff] %vm221, %v216
        %vm223 = vcmask 1041920
        %224 = vst.msk [vmem:[#allocation2 + $0x8] sm:$0x3] %vm223, %v218
        %v225 = vld [vmem:[%s2] sm:$0x1]
        %v227 = vlaneseq
        %v228 = vshrl.u32 %v227, 7
        %v229 = vsub.s32 0, %v228
        %v230 = vrot.slane %v225, %v229
        %v232 = vld [vmem:[#allocation2] sm:$0xff]
        %v233 = vld [vmem:[%s1] sm:$0xff]
        %v234 = vld [vmem:[%s1 + $0x8] sm:$0xff]
        %v235 = vld [vmem:[%s1 + $0x10] sm:$0xff]
        %v236 = vld [vmem:[%s1 + $0x18] sm:$0xff]
        %v237 = vld [vmem:[%s1 + $0x20] sm:$0xff]
        %v238 = vld [vmem:[%s1 + $0x28] sm:$0xff]
        %v239 = vld [vmem:[%s1 + $0x30] sm:$0xff]
        %v240 = vld [vmem:[%s1 + $0x38] sm:$0xff]
        %v241 = vld [vmem:[%s1 + $0x40] sm:$0xff]
        %v242 = vld [vmem:[%s1 + $0x48] sm:$0xff]
        %v243 = vld [vmem:[%s1 + $0x50] sm:$0xff]
        %v244 = vld [vmem:[%s1 + $0x58] sm:$0xff]
        %v245 = vld [vmem:[%s1 + $0x60] sm:$0xff]
        %v246 = vld [vmem:[%s1 + $0x68] sm:$0xff]
        %v247 = vld [vmem:[%s1 + $0x70] sm:$0xff]
        %v248 = vld [vmem:[%s1 + $0x78] sm:$0xff]
        %249 = vmatprep.subr.mxu0 0.0
        %250 = vmatpush1.msra.mxu0 %v248
        %251 = vmatprep.subr.mxu0 0.0
        %252 = vmatpush1.msra.mxu0 %v247
        %253 = vmatprep.subr.mxu0 0.0
        %254 = vmatpush1.msra.mxu0 %v246
        %255 = vmatprep.subr.mxu0 0.0
        %256 = vmatpush1.msra.mxu0 %v245
        %257 = vmatprep.subr.mxu0 0.0
        %258 = vmatpush1.msra.mxu0 %v244
        %259 = vmatprep.subr.mxu0 0.0
        %260 = vmatpush1.msra.mxu0 %v243
        %261 = vmatprep.subr.mxu0 0.0
        %262 = vmatpush1.msra.mxu0 %v242
        %263 = vmatprep.subr.mxu0 0.0
        %264 = vmatpush1.msra.mxu0 %v241
        %265 = vmatprep.subr.mxu0 0.0
        %266 = vmatpush1.msra.mxu0 %v240
        %267 = vmatprep.subr.mxu0 0.0
        %268 = vmatpush1.msra.mxu0 %v239
        %269 = vmatprep.subr.mxu0 0.0
        %270 = vmatpush1.msra.mxu0 %v238
        %271 = vmatprep.subr.mxu0 0.0
        %272 = vmatpush1.msra.mxu0 %v237
        %273 = vmatprep.subr.mxu0 0.0
        %274 = vmatpush1.msra.mxu0 %v236
        %275 = vmatprep.subr.mxu0 0.0
        %276 = vmatpush1.msra.mxu0 %v235
        %277 = vmatprep.subr.mxu0 0.0
        %278 = vmatpush1.msra.mxu0 %v234
        %279 = vmatprep.subr.mxu0 0.0
        %280 = vmatpush1.msra.mxu0 %v233
        %281 = vmatprep.subr.mxu0 0.0
        %282 = vmatpush2.msra.mxu0 0.0
        %283 = vmatprep.subr.mxu0 0.0
        %284 = vmatpush2.msra.mxu0 0.0
        %285 = vmatprep.subr.mxu0 0.0
        %286 = vmatpush2.msra.mxu0 0.0
        %287 = vmatprep.subr.mxu0 0.0
        %288 = vmatpush2.msra.mxu0 0.0
        %289 = vmatprep.subr.mxu0 0.0
        %290 = vmatpush2.msra.mxu0 0.0
        %291 = vmatprep.subr.mxu0 0.0
        %292 = vmatpush2.msra.mxu0 0.0
        %293 = vmatprep.subr.mxu0 0.0
        %294 = vmatpush2.msra.mxu0 0.0
        %295 = vmatprep.subr.mxu0 0.0
        %296 = vmatpush2.msra.mxu0 0.0
        %297 = vmatprep.subr.mxu0 0.0
        %298 = vmatpush2.msra.mxu0 0.0
        %299 = vmatprep.subr.mxu0 0.0
        %300 = vmatpush2.msra.mxu0 0.0
        %301 = vmatprep.subr.mxu0 0.0
        %302 = vmatpush2.msra.mxu0 0.0
        %303 = vmatprep.subr.mxu0 0.0
        %304 = vmatpush2.msra.mxu0 0.0
        %305 = vmatprep.subr.mxu0 0.0
        %306 = vmatpush2.msra.mxu0 0.0
        %307 = vmatprep.subr.mxu0 0.0
        %308 = vmatpush2.msra.mxu0 0.0
        %309 = vmatprep.subr.mxu0 0.0
        %310 = vmatpush2.msra.mxu0 0.0
        %311 = vmatprep.subr.mxu0 0.0
        %312 = vmatpush2.msra.mxu0 0.0
        %313 = vmatprep.mubr.f32.mxu0 0.0
        %314 = vmatmul.mubr.f32.gmra.mxu0 %v232
        %v315 = vpop.f32.mrf.mxu0
        %v316 = vadd.f32 0.0, %v315
        %v317 = vpop.f32.mrf.mxu0
        %318 = vdwg.mxu0
        %v319 = vadd.f32 %v230, %v316
        %v320 = vld [vmem:[#allocation2 + $0x1] sm:$0xff]
        %s321 = scalar_lea.vmem %s1, 128
        %v322 = vld [vmem:[%s321] sm:$0xff]
        %v323 = vld [vmem:[%s321 + $0x8] sm:$0xff]
        %v324 = vld [vmem:[%s321 + $0x10] sm:$0xff]
        %v325 = vld [vmem:[%s321 + $0x18] sm:$0xff]
        %v326 = vld [vmem:[%s321 + $0x20] sm:$0xff]
        %v327 = vld [vmem:[%s321 + $0x28] sm:$0xff]
        %v328 = vld [vmem:[%s321 + $0x30] sm:$0xff]
        %v329 = vld [vmem:[%s321 + $0x38] sm:$0xff]
        %v330 = vld [vmem:[%s321 + $0x40] sm:$0xff]
        %v331 = vld [vmem:[%s321 + $0x48] sm:$0xff]
        %v332 = vld [vmem:[%s321 + $0x50] sm:$0xff]
        %v333 = vld [vmem:[%s321 + $0x58] sm:$0xff]
        %v334 = vld [vmem:[%s321 + $0x60] sm:$0xff]
        %v335 = vld [vmem:[%s321 + $0x68] sm:$0xff]
        %v336 = vld [vmem:[%s321 + $0x70] sm:$0xff]
        %v337 = vld [vmem:[%s321 + $0x78] sm:$0xff]
        %338 = vmatprep.subr.mxu0 0.0
        %339 = vmatpush1.msra.mxu0 %v337
        %340 = vmatprep.subr.mxu0 0.0
        %341 = vmatpush1.msra.mxu0 %v336
        %342 = vmatprep.subr.mxu0 0.0
        %343 = vmatpush1.msra.mxu0 %v335
        %344 = vmatprep.subr.mxu0 0.0
        %345 = vmatpush1.msra.mxu0 %v334
        %346 = vmatprep.subr.mxu0 0.0
        %347 = vmatpush1.msra.mxu0 %v333
        %348 = vmatprep.subr.mxu0 0.0
        %349 = vmatpush1.msra.mxu0 %v332
        %350 = vmatprep.subr.mxu0 0.0
        %351 = vmatpush1.msra.mxu0 %v331
        %352 = vmatprep.subr.mxu0 0.0
        %353 = vmatpush1.msra.mxu0 %v330
        %354 = vmatprep.subr.mxu0 0.0
        %355 = vmatpush1.msra.mxu0 %v329
        %356 = vmatprep.subr.mxu0 0.0
        %357 = vmatpush1.msra.mxu0 %v328
        %358 = vmatprep.subr.mxu0 0.0
        %359 = vmatpush1.msra.mxu0 %v327
        %360 = vmatprep.subr.mxu0 0.0
        %361 = vmatpush1.msra.mxu0 %v326
        %362 = vmatprep.subr.mxu0 0.0
        %363 = vmatpush1.msra.mxu0 %v325
        %364 = vmatprep.subr.mxu0 0.0
        %365 = vmatpush1.msra.mxu0 %v324
        %366 = vmatprep.subr.mxu0 0.0
        %367 = vmatpush1.msra.mxu0 %v323
        %368 = vmatprep.subr.mxu0 0.0
        %369 = vmatpush1.msra.mxu0 %v322
        %370 = vmatprep.subr.mxu0 0.0
        %371 = vmatpush2.msra.mxu0 0.0
        %372 = vmatprep.subr.mxu0 0.0
        %373 = vmatpush2.msra.mxu0 0.0
        %374 = vmatprep.subr.mxu0 0.0
        %375 = vmatpush2.msra.mxu0 0.0
        %376 = vmatprep.subr.mxu0 0.0
        %377 = vmatpush2.msra.mxu0 0.0
        %378 = vmatprep.subr.mxu0 0.0
        %379 = vmatpush2.msra.mxu0 0.0
        %380 = vmatprep.subr.mxu0 0.0
        %381 = vmatpush2.msra.mxu0 0.0
        %382 = vmatprep.subr.mxu0 0.0
        %383 = vmatpush2.msra.mxu0 0.0
        %384 = vmatprep.subr.mxu0 0.0
        %385 = vmatpush2.msra.mxu0 0.0
        %386 = vmatprep.subr.mxu0 0.0
        %387 = vmatpush2.msra.mxu0 0.0
        %388 = vmatprep.subr.mxu0 0.0
        %389 = vmatpush2.msra.mxu0 0.0
        %390 = vmatprep.subr.mxu0 0.0
        %391 = vmatpush2.msra.mxu0 0.0
        %392 = vmatprep.subr.mxu0 0.0
        %393 = vmatpush2.msra.mxu0 0.0
        %394 = vmatprep.subr.mxu0 0.0
        %395 = vmatpush2.msra.mxu0 0.0
        %396 = vmatprep.subr.mxu0 0.0
        %397 = vmatpush2.msra.mxu0 0.0
        %398 = vmatprep.subr.mxu0 0.0
        %399 = vmatpush2.msra.mxu0 0.0
        %400 = vmatprep.subr.mxu0 0.0
        %401 = vmatpush2.msra.mxu0 0.0
        %402 = vmatprep.mubr.f32.mxu0 0.0
        %403 = vmatmul.mubr.f32.gmra.mxu0 %v320
        %v404 = vpop.f32.mrf.mxu0
        %v405 = vadd.f32 0.0, %v404
        %v406 = vpop.f32.mrf.mxu0
        %407 = vdwg.mxu0
        %v408 = vadd.f32 %v319, %v405
        %v409 = vld [vmem:[#allocation2 + $0x2] sm:$0xff]
        %s410 = scalar_lea.vmem %s1, 256
        %v411 = vld [vmem:[%s410] sm:$0xff]
        %v412 = vld [vmem:[%s410 + $0x8] sm:$0xff]
        %v413 = vld [vmem:[%s410 + $0x10] sm:$0xff]
        %v414 = vld [vmem:[%s410 + $0x18] sm:$0xff]
        %v415 = vld [vmem:[%s410 + $0x20] sm:$0xff]
        %v416 = vld [vmem:[%s410 + $0x28] sm:$0xff]
        %v417 = vld [vmem:[%s410 + $0x30] sm:$0xff]
        %v418 = vld [vmem:[%s410 + $0x38] sm:$0xff]
        %v419 = vld [vmem:[%s410 + $0x40] sm:$0xff]
        %v420 = vld [vmem:[%s410 + $0x48] sm:$0xff]
        %v421 = vld [vmem:[%s410 + $0x50] sm:$0xff]
        %v422 = vld [vmem:[%s410 + $0x58] sm:$0xff]
        %v423 = vld [vmem:[%s410 + $0x60] sm:$0xff]
        %v424 = vld [vmem:[%s410 + $0x68] sm:$0xff]
        %v425 = vld [vmem:[%s410 + $0x70] sm:$0xff]
        %v426 = vld [vmem:[%s410 + $0x78] sm:$0xff]
        %427 = vmatprep.subr.mxu0 0.0
        %428 = vmatpush1.msra.mxu0 %v426
        %429 = vmatprep.subr.mxu0 0.0
        %430 = vmatpush1.msra.mxu0 %v425
        %431 = vmatprep.subr.mxu0 0.0
        %432 = vmatpush1.msra.mxu0 %v424
        %433 = vmatprep.subr.mxu0 0.0
        %434 = vmatpush1.msra.mxu0 %v423
        %435 = vmatprep.subr.mxu0 0.0
        %436 = vmatpush1.msra.mxu0 %v422
        %437 = vmatprep.subr.mxu0 0.0
        %438 = vmatpush1.msra.mxu0 %v421
        %439 = vmatprep.subr.mxu0 0.0
        %440 = vmatpush1.msra.mxu0 %v420
        %441 = vmatprep.subr.mxu0 0.0
        %442 = vmatpush1.msra.mxu0 %v419
        %443 = vmatprep.subr.mxu0 0.0
        %444 = vmatpush1.msra.mxu0 %v418
        %445 = vmatprep.subr.mxu0 0.0
        %446 = vmatpush1.msra.mxu0 %v417
        %447 = vmatprep.subr.mxu0 0.0
        %448 = vmatpush1.msra.mxu0 %v416
        %449 = vmatprep.subr.mxu0 0.0
        %450 = vmatpush1.msra.mxu0 %v415
        %451 = vmatprep.subr.mxu0 0.0
        %452 = vmatpush1.msra.mxu0 %v414
        %453 = vmatprep.subr.mxu0 0.0
        %454 = vmatpush1.msra.mxu0 %v413
        %455 = vmatprep.subr.mxu0 0.0
        %456 = vmatpush1.msra.mxu0 %v412
        %457 = vmatprep.subr.mxu0 0.0
        %458 = vmatpush1.msra.mxu0 %v411
        %459 = vmatprep.subr.mxu0 0.0
        %460 = vmatpush2.msra.mxu0 0.0
        %461 = vmatprep.subr.mxu0 0.0
        %462 = vmatpush2.msra.mxu0 0.0
        %463 = vmatprep.subr.mxu0 0.0
        %464 = vmatpush2.msra.mxu0 0.0
        %465 = vmatprep.subr.mxu0 0.0
        %466 = vmatpush2.msra.mxu0 0.0
        %467 = vmatprep.subr.mxu0 0.0
        %468 = vmatpush2.msra.mxu0 0.0
        %469 = vmatprep.subr.mxu0 0.0
        %470 = vmatpush2.msra.mxu0 0.0
        %471 = vmatprep.subr.mxu0 0.0
        %472 = vmatpush2.msra.mxu0 0.0
        %473 = vmatprep.subr.mxu0 0.0
        %474 = vmatpush2.msra.mxu0 0.0
        %475 = vmatprep.subr.mxu0 0.0
        %476 = vmatpush2.msra.mxu0 0.0
        %477 = vmatprep.subr.mxu0 0.0
        %478 = vmatpush2.msra.mxu0 0.0
        %479 = vmatprep.subr.mxu0 0.0
        %480 = vmatpush2.msra.mxu0 0.0
        %481 = vmatprep.subr.mxu0 0.0
        %482 = vmatpush2.msra.mxu0 0.0
        %483 = vmatprep.subr.mxu0 0.0
        %484 = vmatpush2.msra.mxu0 0.0
        %485 = vmatprep.subr.mxu0 0.0
        %486 = vmatpush2.msra.mxu0 0.0
        %487 = vmatprep.subr.mxu0 0.0
        %488 = vmatpush2.msra.mxu0 0.0
        %489 = vmatprep.subr.mxu0 0.0
        %490 = vmatpush2.msra.mxu0 0.0
        %491 = vmatprep.mubr.f32.mxu0 0.0
        %492 = vmatmul.mubr.f32.gmra.mxu0 %v409
        %v493 = vpop.f32.mrf.mxu0
        %v494 = vadd.f32 0.0, %v493
        %v495 = vpop.f32.mrf.mxu0
        %496 = vdwg.mxu0
        %v497 = vadd.f32 %v408, %v494
        %v498 = vsub.f32 0.0, %v497
        %vm499 = vcmp.gt.f32.partialorder %v498, 0.0
        %v500 = vmul.f32 %v498, 1.442695
        %v501 = vpow.pop %v500
        %v502 = vsub.f32 %v501, 1.0
        %v503 = vsel %vm499, %v498, %v502
        %vm504 = vcmp.gt.f32.partialorder %v497, 0.0
        %v505 = vmul.f32 %v497, 1.442695
        %v506 = vpow.pop %v505
        %v507 = vsub.f32 %v506, 1.0
        %v508 = vsel %vm504, %v497, %v507
        %v509 = vsub.f32 0.0, %v503
        %v510 = vmul.f32 %v509, 1.442695
        %v511 = vpow.pop %v510
        %v512 = vadd.f32 %v511, 1.0
        %v513 = vrcp.pop %v512
        %v514 = vmul.f32 %v508, %v513
        %v516 = vrot.slane %v514, 7
        %v518 = vadd.f32 %v185, %v516
        %v519 = vadd.f32 %v186, %v516
        %vm520 = vcmask 523265
        %521 = vst.msk [vmem:[%s177 - $0x1] sm:$0xfe] %vm520, %v518
        %vm522 = vcmask 516096
        %523 = vst.msk [vmem:[%s177 + $0x7] sm:$0x1] %vm522, %v519
        %s524 = sand.u32 %s107, 1
        %s525 = scalar_lea.sflag [#allocation4], %s524
        %s526 = sand.u32 %s107, 1
        %s527 = smul.addr %s526, 8
        %s528 = scalar_lea.vmem [#allocation3], %s527
        // Predicated region
        $region33: #{tpu_custom_call.1} parent=31 // pred_check
          %p529 = pneg %p117
        $region34: #{tpu_custom_call.1} parent=31 // pred_check_branch
          %531 = sbr.rel (%p529) target = $region36
        $region35: #{tpu_custom_call.1} parent=31 // pred_region
          %s533 = ssub.s32 128, 128
          %534 = vsyncadd %s525, %s533
          %s535 = smul.addr %s21, 2
          %s536 = sadd.s32 %s22, %s535
          %s537 = smul.addr %s536, 128
          %s538 = scalar_lea.hbm %s3, %s537
          %s540 = sshll.u32 %s528, 4
          %s541 = int_to_ptr.vmem [resolvable:$true] %s540
          %543 = dma.vmem_to_hbm [thread:$0]  %s541, 128, %s538, %s525
        $region36: #{tpu_custom_call.1} parent=31 // pred_fallthru
          _
      $region32: #{tpu_custom_call.1} parent=5 // pred_fallthru
        _
      %p544 = scmp.le.s32.totalorder 2, %s12
      // Predicated region
      $region37: #{tpu_custom_call.1} parent=5 // pred_check
        %p545 = pneg %p544
      $region38: #{tpu_custom_call.1} parent=5 // pred_check_branch
        %547 = sbr.rel (%p545) target = $region40
      $region39: #{tpu_custom_call.1} parent=5 // pred_region
        %s548 = ssub.s32 %s12, 2
        // Predicated region
        $region41: #{tpu_custom_call.1} parent=39 // pred_check
          %p549 = pneg %p123
        $region42: #{tpu_custom_call.1} parent=39 // pred_check_branch
          %551 = sbr.rel (%p549) target = $region44
        $region43: #{tpu_custom_call.1} parent=39 // pred_region
          %s552 = sand.u32 %s108, 1
          %s553 = scalar_lea.sflag [#allocation4], %s552
          %s554 = sand.u32 %s108, 1
          %s555 = smul.addr %s554, 8
          %s556 = scalar_lea.vmem [#allocation3], %s555
          %557 = dma.done %s553, 128
        $region44: #{tpu_custom_call.1} parent=39 // pred_fallthru
          _
      $region40: #{tpu_custom_call.1} parent=5 // pred_fallthru
        _
    $region6: #{tpu_custom_call.1} parent=1 // loop_footer
      %s16 = sadd.s32 1, %s12
    $region7: #{tpu_custom_call.1} parent=1 // loop_footer_branch
      %11 = sbr.rel target = $region3
    $region8: #{tpu_custom_call.1} parent=1 // loop_exit
      _
    %558 = vsyncpa [#allocation4], 1
    %s559 = scalar_lea.sflag [#allocation4], 1
    %560 = vsyncpa %s559, 1

</llo_original>
